<compile_context>
chip_gen: v6e
topology: v6e:2x2x1
jax: 0.10.0
libtpu: 0.0.40
codegen_flags: <defaults>
</compile_context>

<pallas_src>
import functools

import jax
import jax.numpy as jnp
from jax.experimental import pallas as pl
from jax.experimental.pallas import tpu as pltpu


def _channel_attention_kernel(x_ref, w1_ref, w2_ref, o_ref, *, inv_hw):
    # x_ref : (1, C, HW)   one batch element, channels on sublanes, spatial on lanes
    # w1_ref: (Cr, C)      fc1 weight (1x1 conv, no bias)
    # w2_ref: (C, Cr)      fc2 weight (1x1 conv, no bias)
    # o_ref : (1, C, HW)
    x = x_ref[0].astype(jnp.float32)           # (C, HW)
    w1 = w1_ref[...].astype(jnp.float32)       # (Cr, C)
    w2 = w2_ref[...].astype(jnp.float32)       # (C, Cr)

    # Global average / max pooling over the spatial (lane) axis.
    avg = jnp.sum(x, axis=-1, keepdims=True) * inv_hw     # (C, 1)
    mx = jnp.max(x, axis=-1, keepdims=True)                # (C, 1)

    # Shared MLP, each branch exactly as in the PyTorch module.
    ha = jnp.maximum(jnp.dot(w1, avg, preferred_element_type=jnp.float32), 0.0)  # (Cr, 1)
    hm = jnp.maximum(jnp.dot(w1, mx, preferred_element_type=jnp.float32), 0.0)   # (Cr, 1)
    oa = jnp.dot(w2, ha, preferred_element_type=jnp.float32)                     # (C, 1)
    om = jnp.dot(w2, hm, preferred_element_type=jnp.float32)                     # (C, 1)

    z = oa + om
    attn = 1.0 / (1.0 + jnp.exp(-z))           # sigmoid, (C, 1)

    o_ref[0] = (x * attn).astype(o_ref.dtype)  # broadcast over the spatial lanes


def channel_attention(x, w1, w2):
    """x: [B, C, H, W]; w1: [C//r, C]; w2: [C, C//r] (1x1 conv weights, no bias)."""
    B, C, H, W = x.shape
    Cr = w1.shape[0]
    assert w1.shape == (Cr, C) and w2.shape == (C, Cr)
    HW = H * W

    # Lane-dense view: spatial on the last (lane) axis, channels on sublanes.
    x3 = x.reshape(B, C, HW)

    # One whole batch element per grid step; size the VMEM limit with headroom
    # (in + out blocks, double-buffered, plus weights) but stay well under the
    # 64 MiB physical VMEM of v7x.
    blk_bytes = C * HW * x3.dtype.itemsize
    w_bytes = (w1.size + w2.size) * 4
    vmem_limit = int(min(max(6 * blk_bytes + 4 * w_bytes + (2 << 20), 16 << 20), 48 << 20))

    kernel = functools.partial(_channel_attention_kernel, inv_hw=1.0 / float(HW))

    out = pl.pallas_call(
        kernel,
        out_shape=jax.ShapeDtypeStruct((B, C, HW), x.dtype),
        grid_spec=pltpu.PrefetchScalarGridSpec(
            num_scalar_prefetch=0,
            grid=(B,),
            in_specs=[
                pl.BlockSpec((1, C, HW), lambda b: (b, 0, 0)),
                pl.BlockSpec((Cr, C), lambda b: (0, 0)),
                pl.BlockSpec((C, Cr), lambda b: (0, 0)),
            ],
            out_specs=pl.BlockSpec((1, C, HW), lambda b: (b, 0, 0)),
        ),
        compiler_params=pltpu.CompilerParams(
            dimension_semantics=("parallel",),   # batch elems independent -> dual-TC on v7x
            vmem_limit_bytes=vmem_limit,
        ),
    )(x3, w1, w2)

    return out.reshape(B, C, H, W)


def _reference(x, w1, w2):
    avg = jnp.mean(x, axis=(2, 3))   # (B, C)
    mx = jnp.max(x, axis=(2, 3))     # (B, C)

    def mlp(v):
        h = jnp.maximum(jnp.einsum("rc,bc->br", w1, v), 0.0)
        return jnp.einsum("cr,br->bc", w2, h)

    attn = jax.nn.sigmoid(mlp(avg) + mlp(mx))
    return x * attn[:, :, None, None]


if __name__ == "__main__":
    key = jax.random.PRNGKey(0)
    kx, k1, k2 = jax.random.split(key, 3)

    # Small shapes consistent with the module (reduction_ratio=16 needs C >= 16).
    B, C, H, W = 2, 64, 16, 16
    reduction_ratio = 16
    Cr = C // reduction_ratio

    x = jax.random.normal(kx, (B, C, H, W), dtype=jnp.float32)
    w1 = jax.random.normal(k1, (Cr, C), dtype=jnp.float32) * (1.0 / jnp.sqrt(C))
    w2 = jax.random.normal(k2, (C, Cr), dtype=jnp.float32) * (1.0 / jnp.sqrt(Cr))

    out = channel_attention(x, w1, w2)
    out = jax.block_until_ready(out)

    ref = _reference(x, w1, w2)
    assert out.shape == ref.shape, (out.shape, ref.shape)
    assert jnp.allclose(out, ref, rtol=1e-5, atol=1e-5), float(jnp.max(jnp.abs(out - ref)))

    print("KERNEL_OK")
</pallas_src>

<mosaic_0001>
module attributes {stable_mosaic.version = 11 : i64} {
  func.func @_channel_attention_kernel(%arg0: i32, %arg1: memref<1x64x256xf32, #tpu.memory_space<vmem>>, %arg2: memref<4x64xf32, #tpu.memory_space<vmem>>, %arg3: memref<64x4xf32, #tpu.memory_space<vmem>>, %arg4: memref<1x64x256xf32, #tpu.memory_space<vmem>>) attributes {dimension_semantics = [#tpu.dimension_semantics<parallel>], iteration_bounds = array<i64: 2>, scalar_prefetch = 0 : i64, scratch_operands = 0 : i64, tpu.core_type = #tpu.core_type<tc>, window_params = [{transform_indices = @transform_0, window_bounds = array<i64: 1, 64, 256>}, {pipeline_mode = #tpu.pipeline_mode<synchronous>, transform_indices = @transform_1, window_bounds = array<i64: 4, 64>}, {pipeline_mode = #tpu.pipeline_mode<synchronous>, transform_indices = @transform_2, window_bounds = array<i64: 64, 4>}, {transform_indices = @transform_3, window_bounds = array<i64: 1, 64, 256>}]} {
    %c0 = arith.constant 0 : index
    %c0_0 = arith.constant 0 : index
    %c0_1 = arith.constant 0 : index
    %0 = vector.load %arg1[%c0, %c0_0, %c0_1] : memref<1x64x256xf32, #tpu.memory_space<vmem>>, vector<1x64x256xf32>
    %1 = vector.shape_cast %0 : vector<1x64x256xf32> to vector<64x256xf32>
    %c0_2 = arith.constant 0 : index
    %c0_3 = arith.constant 0 : index
    %2 = vector.load %arg2[%c0_2, %c0_3] : memref<4x64xf32, #tpu.memory_space<vmem>>, vector<4x64xf32>
    %c0_4 = arith.constant 0 : index
    %c0_5 = arith.constant 0 : index
    %3 = vector.load %arg3[%c0_4, %c0_5] : memref<64x4xf32, #tpu.memory_space<vmem>>, vector<64x4xf32>
    %cst = arith.constant dense<0.000000e+00> : vector<64xf32>
    %4 = vector.multi_reduction <add>, %1, %cst [1] : vector<64x256xf32> to vector<64xf32>
    %5 = vector.shape_cast %4 : vector<64xf32> to vector<64x1xf32>
    %cst_6 = arith.constant 3.906250e-03 : f32
    %6 = vector.broadcast %cst_6 : f32 to vector<64x1xf32>
    %7 = arith.mulf %5, %6 : vector<64x1xf32>
    %cst_7 = arith.constant dense<0xFF800000> : vector<64xf32>
    %8 = vector.multi_reduction <maximumf>, %1, %cst_7 [1] : vector<64x256xf32> to vector<64xf32>
    %9 = vector.shape_cast %8 : vector<64xf32> to vector<64x1xf32>
    %cst_8 = arith.constant dense<0.000000e+00> : vector<4x1xf32>
    %10 = tpu.matmul %2, %7, %cst_8 {dimension_numbers = #tpu.dot_dimension_numbers<[1], [0], [0], [1], [0, 0, 1, 1], [], []>} : vector<4x64xf32>, vector<64x1xf32>, vector<4x1xf32> -> vector<4x1xf32>
    %cst_9 = arith.constant 0.000000e+00 : f32
    %11 = vector.broadcast %cst_9 : f32 to vector<4x1xf32>
    %12 = arith.maximumf %10, %11 : vector<4x1xf32>
    %cst_10 = arith.constant dense<0.000000e+00> : vector<4x1xf32>
    %13 = tpu.matmul %2, %9, %cst_10 {dimension_numbers = #tpu.dot_dimension_numbers<[1], [0], [0], [1], [0, 0, 1, 1], [], []>} : vector<4x64xf32>, vector<64x1xf32>, vector<4x1xf32> -> vector<4x1xf32>
    %cst_11 = arith.constant 0.000000e+00 : f32
    %14 = vector.broadcast %cst_11 : f32 to vector<4x1xf32>
    %15 = arith.maximumf %13, %14 : vector<4x1xf32>
    %cst_12 = arith.constant dense<0.000000e+00> : vector<64x1xf32>
    %16 = tpu.matmul %3, %12, %cst_12 {dimension_numbers = #tpu.dot_dimension_numbers<[1], [0], [0], [1], [0, 0, 1, 1], [], []>} : vector<64x4xf32>, vector<4x1xf32>, vector<64x1xf32> -> vector<64x1xf32>
    %cst_13 = arith.constant dense<0.000000e+00> : vector<64x1xf32>
    %17 = tpu.matmul %3, %15, %cst_13 {dimension_numbers = #tpu.dot_dimension_numbers<[1], [0], [0], [1], [0, 0, 1, 1], [], []>} : vector<64x4xf32>, vector<4x1xf32>, vector<64x1xf32> -> vector<64x1xf32>
    %18 = arith.addf %16, %17 : vector<64x1xf32>
    %cst_14 = arith.constant 0.000000e+00 : f32
    %19 = vector.broadcast %cst_14 : f32 to vector<64x1xf32>
    %20 = arith.subf %19, %18 : vector<64x1xf32>
    %21 = math.exp %20 : vector<64x1xf32>
    %cst_15 = arith.constant 1.000000e+00 : f32
    %22 = vector.broadcast %cst_15 : f32 to vector<64x1xf32>
    %23 = arith.addf %22, %21 : vector<64x1xf32>
    %cst_16 = arith.constant 1.000000e+00 : f32
    %24 = vector.broadcast %cst_16 : f32 to vector<64x1xf32>
    %25 = arith.divf %24, %23 : vector<64x1xf32>
    %26 = vector.broadcast %25 : vector<64x1xf32> to vector<64x256xf32>
    %27 = arith.mulf %1, %26 : vector<64x256xf32>
    %c0_17 = arith.constant 0 : index
    %c0_18 = arith.constant 0 : index
    %c0_19 = arith.constant 0 : index
    %28 = vector.load %arg4[%c0_17, %c0_18, %c0_19] : memref<1x64x256xf32, #tpu.memory_space<vmem>>, vector<1x64x256xf32>
    %29 = vector.shape_cast %28 : vector<1x64x256xf32> to vector<64x256xf32>
    %30 = vector.shape_cast %27 : vector<64x256xf32> to vector<1x64x256xf32>
    tpu.vector_store %arg4[%c0_17, %c0_18, %c0_19], %30 {strides = array<i32>} : memref<1x64x256xf32, #tpu.memory_space<vmem>>, vector<1x64x256xf32>,
    return
  }
  func.func @transform_0(%arg0: i32) -> (i32, i32, i32) {
    %c0_i32 = arith.constant 0 : i32
    %c0_i32_0 = arith.constant 0 : i32
    %c0_i32_1 = arith.constant 0 : i32
    return %arg0, %c0_i32, %c0_i32_0 : i32, i32, i32
  }
  func.func @transform_1(%arg0: i32) -> (i32, i32) {
    %c0_i32 = arith.constant 0 : i32
    %c0_i32_0 = arith.constant 0 : i32
    %c0_i32_1 = arith.constant 0 : i32
    return %c0_i32, %c0_i32_0 : i32, i32
  }
  func.func @transform_2(%arg0: i32) -> (i32, i32) {
    %c0_i32 = arith.constant 0 : i32
    %c0_i32_0 = arith.constant 0 : i32
    %c0_i32_1 = arith.constant 0 : i32
    return %c0_i32, %c0_i32_0 : i32, i32
  }
  func.func @transform_3(%arg0: i32) -> (i32, i32, i32) {
    %c0_i32 = arith.constant 0 : i32
    %c0_i32_0 = arith.constant 0 : i32
    %c0_i32_1 = arith.constant 0 : i32
    return %arg0, %c0_i32, %c0_i32_0 : i32, i32, i32
  }
}

</mosaic_0001>

<llo_original>
// kernel: tpu_custom_call.1
$region0: #{tpu_custom_call.1}
  #allocation0 [shape = 'u32[]', space=smem, size = 0x4, offset = 0x4, fixed_abs, tag = 'smem constant byte address 0x4 - core index']
  #allocation1 [shape = 'u32[144,128]{1,0:T(1,128)}', space=vmem, size = 0x12000, scoped, tag = 'internal scratch']
  %s0 = inlined_call_operand.hbm [shape: f32[2,64,256], index: 0, kind: input, shape index: {}]
  %s1 = inlined_call_operand.vmem [shape: f32[4,64], index: 1, kind: input, shape index: {}]
  %s2 = inlined_call_operand.vmem [shape: f32[64,4], index: 2, kind: input, shape index: {}]
  %s3 = inlined_call_operand.hbm [shape: f32[2,64,256], index: 3, kind: output, shape index: {}]
  %s4 = sld [smem:[#allocation0]]
  $region49: #{tpu_custom_call.1} parent=0
    _
  %s6 = ssub.s32 1, %s4
  %s7 = scalar_select 0, %s6, %s4
  $region1: #{tpu_custom_call.1} parent=0
    #allocation2 [shape = 'u8[131072]{0}', space=vmem, size = 0x20000, scoped, tag = 'input window, operand 0']
    #allocation3 [shape = 's32[2]{0}', space=sflag, size = 0x8, scoped, tag = 'scoped memory for tpu_custom_call.1']
    #allocation4 [shape = 's32[2]{0}', space=sflag, size = 0x8, scoped, tag = 'scoped memory for tpu_custom_call.1']
    #allocation5 [shape = 'u8[131072]{0}', space=vmem, size = 0x20000, scoped, tag = 'output window, operand 0']
    %8 = vsyncpa [#allocation3], 0
    %s9 = scalar_lea.sflag [#allocation3], 1
    %10 = vsyncpa %s9, 0
    %11 = vsyncpa [#allocation4], 0
    %s12 = scalar_lea.sflag [#allocation4], 1
    %13 = vsyncpa %s12, 0
    loop: start=0, step=1, limit=4
    $region2: #{tpu_custom_call.1} parent=1 // loop_pre_header
      _
    $region3: #{tpu_custom_call.1} parent=1 // loop_header
      %s15 = sphi 0, %s19
      %p16 = scmp.ge.s32.totalorder %s15, 4
      %s25 = sphi 0, %s27
      %s28 = sphi 0, %s25
      %s29 = sphi 0, %s28
      %s45 = sphi 0, %s29
      %s49 = sphi 0, %s49
      %s51 = sphi 0, %s49
      %s52 = sphi 0, %s51
      %s66 = sphi 0, %s52
      %s70 = sphi 0, %s70
      %s72 = sphi 0, %s70
      %s73 = sphi 0, %s72
      %s87 = sphi 0, %s73
      %s93 = sphi 0, %s95
      %s96 = sphi 0, %s93
      %s97 = sphi 0, %s96
      %s113 = sphi 0, %s97
    $region4: #{tpu_custom_call.1} parent=1 // loop_header_branch
      %18 = sbr.rel (%p16) target = $region8
    $region5: #{tpu_custom_call.1} parent=1 // loop_body
      %s20 = ssub.s32 %s15, 1
      %s21 = ssub.s32 %s15, 2
      %s22 = sadd.s32 %s15, 1
      %s23 = ssub.s32 %s15, %s22
      %p24 = scmp.eq.s32.totalorder %s23, 0
      %s26 = sadd.s32 %s25, 1
      %s27 = scalar_select %p24, %s25, %s26
      %p30 = pneg %p24
      %p31 = scmp.eq.s32.totalorder %s15, 1
      %p32 = por %p30, %p31
      %p33 = scmp.ne.s32.totalorder %s25, %s28
      %p34 = scmp.eq.s32.totalorder %s15, 0
      %p35 = por %p33, %p34
      %p36 = scmp.ne.s32.totalorder %s25, %s28
      %p37 = scmp.eq.s32.totalorder %s20, 1
      %p38 = por %p36, %p37
      %p39 = scmp.ne.s32.totalorder %s28, %s29
      %p40 = scmp.eq.s32.totalorder %s20, 0
      %p41 = por %p39, %p40
      %p42 = scmp.ne.s32.totalorder %s28, %s29
      %p43 = scmp.eq.s32.totalorder %s21, 1
      %p44 = por %p42, %p43
      %p46 = scmp.ne.s32.totalorder %s29, %s45
      %p47 = scmp.eq.s32.totalorder %s21, 0
      %p48 = por %p46, %p47
      %s50 = sadd.s32 %s49, 1
      %p53 = scmp.eq.s32.totalorder %s15, 1
      %p54 = scmp.ne.s32.totalorder %s49, %s51
      %p55 = scmp.eq.s32.totalorder %s15, 0
      %p56 = por %p54, %p55
      %p57 = scmp.ne.s32.totalorder %s49, %s51
      %p58 = scmp.eq.s32.totalorder %s20, 1
      %p59 = por %p57, %p58
      %p60 = scmp.ne.s32.totalorder %s51, %s52
      %p61 = scmp.eq.s32.totalorder %s20, 0
      %p62 = por %p60, %p61
      %p63 = scmp.ne.s32.totalorder %s51, %s52
      %p64 = scmp.eq.s32.totalorder %s21, 1
      %p65 = por %p63, %p64
      %p67 = scmp.ne.s32.totalorder %s52, %s66
      %p68 = scmp.eq.s32.totalorder %s21, 0
      %p69 = por %p67, %p68
      %s71 = sadd.s32 %s70, 1
      %p74 = scmp.eq.s32.totalorder %s15, 1
      %p75 = scmp.ne.s32.totalorder %s70, %s72
      %p76 = scmp.eq.s32.totalorder %s15, 0
      %p77 = por %p75, %p76
      %p78 = scmp.ne.s32.totalorder %s70, %s72
      %p79 = scmp.eq.s32.totalorder %s20, 1
      %p80 = por %p78, %p79
      %p81 = scmp.ne.s32.totalorder %s72, %s73
      %p82 = scmp.eq.s32.totalorder %s20, 0
      %p83 = por %p81, %p82
      %p84 = scmp.ne.s32.totalorder %s72, %s73
      %p85 = scmp.eq.s32.totalorder %s21, 1
      %p86 = por %p84, %p85
      %p88 = scmp.ne.s32.totalorder %s73, %s87
      %p89 = scmp.eq.s32.totalorder %s21, 0
      %p90 = por %p88, %p89
      %s91 = ssub.s32 %s15, %s22
      %p92 = scmp.eq.s32.totalorder %s91, 0
      %s94 = sadd.s32 %s93, 1
      %s95 = scalar_select %p92, %s93, %s94
      %p98 = pneg %p92
      %p99 = scmp.eq.s32.totalorder %s15, 1
      %p100 = por %p98, %p99
      %p101 = scmp.ne.s32.totalorder %s93, %s96
      %p102 = scmp.eq.s32.totalorder %s15, 0
      %p103 = por %p101, %p102
      %p104 = scmp.ne.s32.totalorder %s93, %s96
      %p105 = scmp.eq.s32.totalorder %s20, 1
      %p106 = por %p104, %p105
      %p107 = scmp.ne.s32.totalorder %s96, %s97
      %p108 = scmp.eq.s32.totalorder %s20, 0
      %p109 = por %p107, %p108
      %p110 = scmp.ne.s32.totalorder %s96, %s97
      %p111 = scmp.eq.s32.totalorder %s21, 1
      %p112 = por %p110, %p111
      %p114 = scmp.ne.s32.totalorder %s97, %s113
      %p115 = scmp.eq.s32.totalorder %s21, 0
      %p116 = por %p114, %p115
      %p117 = scmp.le.s32.totalorder 1, %s15
      %p118 = scmp.lt.s32.totalorder %s15, 3
      %p119 = pnand %p117, %p118
      %p120 = pneg %p119
      // Predicated region
      $region9: #{tpu_custom_call.1} parent=5 // pred_check
        _
      $region10: #{tpu_custom_call.1} parent=5 // pred_check_branch
        %122 = sbr.rel (%p119) target = $region12
      $region11: #{tpu_custom_call.1} parent=5 // pred_region
        %s123 = ssub.s32 %s15, 1
        // Predicated region
        $region13: #{tpu_custom_call.1} parent=11 // pred_check
          %p124 = pneg %p62
        $region14: #{tpu_custom_call.1} parent=11 // pred_check_branch
          %126 = sbr.rel (%p124) target = $region16
        $region15: #{tpu_custom_call.1} parent=11 // pred_region
          _
        $region16: #{tpu_custom_call.1} parent=11 // pred_fallthru
          _
        // Predicated region
        $region17: #{tpu_custom_call.1} parent=11 // pred_check
          %p127 = pneg %p83
        $region18: #{tpu_custom_call.1} parent=11 // pred_check_branch
          %129 = sbr.rel (%p127) target = $region20
        $region19: #{tpu_custom_call.1} parent=11 // pred_region
          _
        $region20: #{tpu_custom_call.1} parent=11 // pred_fallthru
          _
      $region12: #{tpu_custom_call.1} parent=5 // pred_fallthru
        _
      %p130 = scmp.lt.s32.totalorder %s15, 2
      // Predicated region
      $region21: #{tpu_custom_call.1} parent=5 // pred_check
        %p131 = pneg %p130
      $region22: #{tpu_custom_call.1} parent=5 // pred_check_branch
        %133 = sbr.rel (%p131) target = $region24
      $region23: #{tpu_custom_call.1} parent=5 // pred_region
        // Predicated region
        $region25: #{tpu_custom_call.1} parent=23 // pred_check
          %p134 = pneg %p35
        $region26: #{tpu_custom_call.1} parent=23 // pred_check_branch
          %136 = sbr.rel (%p134) target = $region28
        $region27: #{tpu_custom_call.1} parent=23 // pred_region
          %s137 = sand.u32 %s25, 1
          %s138 = scalar_lea.sflag [#allocation3], %s137
          %s139 = sand.u32 %s25, 1
          %s140 = smul.addr %s139, 128
          %s141 = scalar_lea.vmem [#allocation2], %s140
          %s143 = ssub.s32 2048, 2048
          %144 = vsyncadd %s138, %s143
          %s145 = smul.addr %s15, 16
          %s146 = smul.addr %s145, 128
          %s147 = scalar_lea.hbm %s0, %s146
          %s148 = sshll.u32 %s141, 4
          %s149 = int_to_ptr.vmem [resolvable:$true] %s148
          %154 = dma.hbm_to_vmem [thread:$0]  %s147, 2048, %s149, %s138, 256, 256, 16
        $region28: #{tpu_custom_call.1} parent=23 // pred_fallthru
          _
      $region24: #{tpu_custom_call.1} parent=5 // pred_fallthru
        _
      %p155 = scmp.le.s32.totalorder 1, %s15
      %p156 = scmp.lt.s32.totalorder %s15, 3
      %p157 = pnand %p155, %p156
      %p158 = pneg %p157
      // Predicated region
      $region29: #{tpu_custom_call.1} parent=5 // pred_check
        _
      $region30: #{tpu_custom_call.1} parent=5 // pred_check_branch
        %160 = sbr.rel (%p157) target = $region32
      $region31: #{tpu_custom_call.1} parent=5 // pred_region
        %s161 = ssub.s32 %s15, 1
        %s162 = sand.u32 %s28, 1
        %s163 = scalar_lea.sflag [#allocation3], %s162
        %s164 = sand.u32 %s28, 1
        %s165 = smul.addr %s164, 128
        %s166 = scalar_lea.vmem [#allocation2], %s165
        // Predicated region
        $region33: #{tpu_custom_call.1} parent=31 // pred_check
          %p167 = pneg %p41
        $region34: #{tpu_custom_call.1} parent=31 // pred_check_branch
          %169 = sbr.rel (%p167) target = $region36
        $region35: #{tpu_custom_call.1} parent=31 // pred_region
          %170 = dma.done %s163, 2048
        $region36: #{tpu_custom_call.1} parent=31 // pred_fallthru
          _
        %s171 = sand.u32 %s28, 1
        %s172 = scalar_lea.sflag [#allocation3], %s171
        %s173 = sand.u32 %s28, 1
        %s174 = smul.addr %s173, 128
        %s175 = scalar_lea.vmem [#allocation2], %s174
        %p176 = pneg %p41
        %p177 = pneg %p38
        %p178 = pneg %p62
        %p179 = pneg %p59
        %p180 = pneg %p83
        %p181 = pneg %p80
        %p182 = pneg %p109
        %p183 = pneg %p106
        %s184 = sand.u32 %s96, 1
        %s185 = scalar_lea.sflag [#allocation4], %s184
        %s186 = sand.u32 %s96, 1
        %s187 = smul.addr %s186, 128
        %s188 = scalar_lea.vmem [#allocation5], %s187
        %v189 = vld [vmem:[%s166] sm:$0xff]
        %v190 = vld [vmem:[%s166 + $0x8] sm:$0xff]
        %v191 = vld [vmem:[%s166 + $0x10] sm:$0xff]
        %v192 = vld [vmem:[%s166 + $0x18] sm:$0xff]
        %v193 = vld [vmem:[%s166 + $0x20] sm:$0xff]
        %v194 = vld [vmem:[%s166 + $0x28] sm:$0xff]
        %v195 = vld [vmem:[%s166 + $0x30] sm:$0xff]
        %v196 = vld [vmem:[%s166 + $0x38] sm:$0xff]
        %v197 = vld [vmem:[%s166 + $0x40] sm:$0xff]
        %v198 = vld [vmem:[%s166 + $0x48] sm:$0xff]
        %v199 = vld [vmem:[%s166 + $0x50] sm:$0xff]
        %v200 = vld [vmem:[%s166 + $0x58] sm:$0xff]
        %v201 = vld [vmem:[%s166 + $0x60] sm:$0xff]
        %v202 = vld [vmem:[%s166 + $0x68] sm:$0xff]
        %v203 = vld [vmem:[%s166 + $0x70] sm:$0xff]
        %v204 = vld [vmem:[%s166 + $0x78] sm:$0xff]
        %v205 = vld [vmem:[%s1] sm:$0xf]
        %v206 = vld [vmem:[%s2] sm:$0xff]
        %v207 = vld [vmem:[%s2 + $0x8] sm:$0xff]
        %v208 = vld [vmem:[%s2 + $0x10] sm:$0xff]
        %v209 = vld [vmem:[%s2 + $0x18] sm:$0xff]
        %v210 = vld [vmem:[%s2 + $0x20] sm:$0xff]
        %v211 = vld [vmem:[%s2 + $0x28] sm:$0xff]
        %v212 = vld [vmem:[%s2 + $0x30] sm:$0xff]
        %v213 = vld [vmem:[%s2 + $0x38] sm:$0xff]
        %v214 = vadd.f32 %v189, %v190
        %215 = vadd.xlane.f32.xlu0 %v214
        %v216 = vpop.xlane.xlu0 %215
        %v217 = vadd.f32 %v191, %v192
        %218 = vadd.xlane.f32.xlu0 %v217
        %v219 = vpop.xlane.xlu0 %218
        %v220 = vadd.f32 %v193, %v194
        %221 = vadd.xlane.f32.xlu0 %v220
        %v222 = vpop.xlane.xlu0 %221
        %v223 = vadd.f32 %v195, %v196
        %224 = vadd.xlane.f32.xlu0 %v223
        %v225 = vpop.xlane.xlu0 %224
        %v226 = vadd.f32 %v197, %v198
        %227 = vadd.xlane.f32.xlu0 %v226
        %v228 = vpop.xlane.xlu0 %227
        %v229 = vadd.f32 %v199, %v200
        %230 = vadd.xlane.f32.xlu0 %v229
        %v231 = vpop.xlane.xlu0 %230
        %v232 = vadd.f32 %v201, %v202
        %233 = vadd.xlane.f32.xlu0 %v232
        %v234 = vpop.xlane.xlu0 %233
        %v235 = vadd.f32 %v203, %v204
        %236 = vadd.xlane.f32.xlu0 %v235
        %v237 = vpop.xlane.xlu0 %236
        %v238 = vmul.f32 %v216, 0.00390625
        %v239 = vmul.f32 %v219, 0.00390625
        %v240 = vmul.f32 %v222, 0.00390625
        %v241 = vmul.f32 %v225, 0.00390625
        %v242 = vmul.f32 %v228, 0.00390625
        %v243 = vmul.f32 %v231, 0.00390625
        %v244 = vmul.f32 %v234, 0.00390625
        %v245 = vmul.f32 %v237, 0.00390625
        %v246 = vmax.f32 %v189, %v190
        %247 = vmax.xlane.f32.xlu0 %v246
        %v248 = vpop.xlane.xlu0 %247
        %v249 = vmax.f32 %v191, %v192
        %250 = vmax.xlane.f32.xlu0 %v249
        %v251 = vpop.xlane.xlu0 %250
        %v252 = vmax.f32 %v193, %v194
        %253 = vmax.xlane.f32.xlu0 %v252
        %v254 = vpop.xlane.xlu0 %253
        %v255 = vmax.f32 %v195, %v196
        %256 = vmax.xlane.f32.xlu0 %v255
        %v257 = vpop.xlane.xlu0 %256
        %v258 = vmax.f32 %v197, %v198
        %259 = vmax.xlane.f32.xlu0 %v258
        %v260 = vpop.xlane.xlu0 %259
        %v261 = vmax.f32 %v199, %v200
        %262 = vmax.xlane.f32.xlu0 %v261
        %v263 = vpop.xlane.xlu0 %262
        %v264 = vmax.f32 %v201, %v202
        %265 = vmax.xlane.f32.xlu0 %v264
        %v266 = vpop.xlane.xlu0 %265
        %v267 = vmax.f32 %v203, %v204
        %268 = vmax.xlane.f32.xlu0 %v267
        %v269 = vpop.xlane.xlu0 %268
        %vm270 = vcmask 523264
        %v272 = vsel %vm270, %v205, 0
        %274 = vmatprep.subr.mxu0 0.0
        %275 = vmatpush1.msra.mxu0 0.0
        %276 = vmatprep.subr.mxu0 0.0
        %277 = vmatpush1.msra.mxu0 0.0
        %278 = vmatprep.subr.mxu0 0.0
        %279 = vmatpush1.msra.mxu0 0.0
        %280 = vmatprep.subr.mxu0 0.0
        %281 = vmatpush1.msra.mxu0 0.0
        %282 = vmatprep.subr.mxu0 0.0
        %283 = vmatpush1.msra.mxu0 0.0
        %284 = vmatprep.subr.mxu0 0.0
        %285 = vmatpush1.msra.mxu0 0.0
        %286 = vmatprep.subr.mxu0 0.0
        %287 = vmatpush1.msra.mxu0 0.0
        %288 = vmatprep.subr.mxu0 0.0
        %289 = vmatpush1.msra.mxu0 0.0
        %290 = vmatprep.subr.mxu0 0.0
        %291 = vmatpush1.msra.mxu0 %v245
        %292 = vmatprep.subr.mxu0 0.0
        %293 = vmatpush1.msra.mxu0 %v244
        %294 = vmatprep.subr.mxu0 0.0
        %295 = vmatpush1.msra.mxu0 %v243
        %296 = vmatprep.subr.mxu0 0.0
        %297 = vmatpush1.msra.mxu0 %v242
        %298 = vmatprep.subr.mxu0 0.0
        %299 = vmatpush1.msra.mxu0 %v241
        %300 = vmatprep.subr.mxu0 0.0
        %301 = vmatpush1.msra.mxu0 %v240
        %302 = vmatprep.subr.mxu0 0.0
        %303 = vmatpush1.msra.mxu0 %v239
        %304 = vmatprep.subr.mxu0 0.0
        %305 = vmatpush1.msra.mxu0 %v238
        %306 = vmatprep.subr.mxu0 0.0
        %307 = vmatpush2.msra.mxu0 0.0
        %308 = vmatprep.subr.mxu0 0.0
        %309 = vmatpush2.msra.mxu0 0.0
        %310 = vmatprep.subr.mxu0 0.0
        %311 = vmatpush2.msra.mxu0 0.0
        %312 = vmatprep.subr.mxu0 0.0
        %313 = vmatpush2.msra.mxu0 0.0
        %314 = vmatprep.subr.mxu0 0.0
        %315 = vmatpush2.msra.mxu0 0.0
        %316 = vmatprep.subr.mxu0 0.0
        %317 = vmatpush2.msra.mxu0 0.0
        %318 = vmatprep.subr.mxu0 0.0
        %319 = vmatpush2.msra.mxu0 0.0
        %320 = vmatprep.subr.mxu0 0.0
        %321 = vmatpush2.msra.mxu0 0.0
        %322 = vmatprep.subr.mxu0 0.0
        %323 = vmatpush2.msra.mxu0 0.0
        %324 = vmatprep.subr.mxu0 0.0
        %325 = vmatpush2.msra.mxu0 0.0
        %326 = vmatprep.subr.mxu0 0.0
        %327 = vmatpush2.msra.mxu0 0.0
        %328 = vmatprep.subr.mxu0 0.0
        %329 = vmatpush2.msra.mxu0 0.0
        %330 = vmatprep.subr.mxu0 0.0
        %331 = vmatpush2.msra.mxu0 0.0
        %332 = vmatprep.subr.mxu0 0.0
        %333 = vmatpush2.msra.mxu0 0.0
        %334 = vmatprep.subr.mxu0 0.0
        %335 = vmatpush2.msra.mxu0 0.0
        %336 = vmatprep.subr.mxu0 0.0
        %337 = vmatpush2.msra.mxu0 0.0
        %338 = vmatprep.mubr.f32.mxu0 0.0
        %339 = vmatmul.mubr.f32.gmra.mxu0 %v272
        %v340 = vpop.f32.mrf.mxu0
        %v341 = vadd.f32 0.0, %v340
        %v342 = vpop.f32.mrf.mxu0
        %343 = vdwg.mxu0
        %v344 = vmax.f32 %v341, 0.0
        %345 = vmatprep.subr.mxu0 0.0
        %346 = vmatpush1.msra.mxu0 0.0
        %347 = vmatprep.subr.mxu0 0.0
        %348 = vmatpush1.msra.mxu0 0.0
        %349 = vmatprep.subr.mxu0 0.0
        %350 = vmatpush1.msra.mxu0 0.0
        %351 = vmatprep.subr.mxu0 0.0
        %352 = vmatpush1.msra.mxu0 0.0
        %353 = vmatprep.subr.mxu0 0.0
        %354 = vmatpush1.msra.mxu0 0.0
        %355 = vmatprep.subr.mxu0 0.0
        %356 = vmatpush1.msra.mxu0 0.0
        %357 = vmatprep.subr.mxu0 0.0
        %358 = vmatpush1.msra.mxu0 0.0
        %359 = vmatprep.subr.mxu0 0.0
        %360 = vmatpush1.msra.mxu0 0.0
        %361 = vmatprep.subr.mxu0 0.0
        %362 = vmatpush1.msra.mxu0 %v269
        %363 = vmatprep.subr.mxu0 0.0
        %364 = vmatpush1.msra.mxu0 %v266
        %365 = vmatprep.subr.mxu0 0.0
        %366 = vmatpush1.msra.mxu0 %v263
        %367 = vmatprep.subr.mxu0 0.0
        %368 = vmatpush1.msra.mxu0 %v260
        %369 = vmatprep.subr.mxu0 0.0
        %370 = vmatpush1.msra.mxu0 %v257
        %371 = vmatprep.subr.mxu0 0.0
        %372 = vmatpush1.msra.mxu0 %v254
        %373 = vmatprep.subr.mxu0 0.0
        %374 = vmatpush1.msra.mxu0 %v251
        %375 = vmatprep.subr.mxu0 0.0
        %376 = vmatpush1.msra.mxu0 %v248
        %377 = vmatprep.subr.mxu0 0.0
        %378 = vmatpush2.msra.mxu0 0.0
        %379 = vmatprep.subr.mxu0 0.0
        %380 = vmatpush2.msra.mxu0 0.0
        %381 = vmatprep.subr.mxu0 0.0
        %382 = vmatpush2.msra.mxu0 0.0
        %383 = vmatprep.subr.mxu0 0.0
        %384 = vmatpush2.msra.mxu0 0.0
        %385 = vmatprep.subr.mxu0 0.0
        %386 = vmatpush2.msra.mxu0 0.0
        %387 = vmatprep.subr.mxu0 0.0
        %388 = vmatpush2.msra.mxu0 0.0
        %389 = vmatprep.subr.mxu0 0.0
        %390 = vmatpush2.msra.mxu0 0.0
        %391 = vmatprep.subr.mxu0 0.0
        %392 = vmatpush2.msra.mxu0 0.0
        %393 = vmatprep.subr.mxu0 0.0
        %394 = vmatpush2.msra.mxu0 0.0
        %395 = vmatprep.subr.mxu0 0.0
        %396 = vmatpush2.msra.mxu0 0.0
        %397 = vmatprep.subr.mxu0 0.0
        %398 = vmatpush2.msra.mxu0 0.0
        %399 = vmatprep.subr.mxu0 0.0
        %400 = vmatpush2.msra.mxu0 0.0
        %401 = vmatprep.subr.mxu0 0.0
        %402 = vmatpush2.msra.mxu0 0.0
        %403 = vmatprep.subr.mxu0 0.0
        %404 = vmatpush2.msra.mxu0 0.0
        %405 = vmatprep.subr.mxu0 0.0
        %406 = vmatpush2.msra.mxu0 0.0
        %407 = vmatprep.subr.mxu0 0.0
        %408 = vmatpush2.msra.mxu0 0.0
        %409 = vmatprep.mubr.f32.mxu0 0.0
        %410 = vmatmul.mubr.f32.gmra.mxu0 %v272
        %v411 = vpop.f32.mrf.mxu0
        %v412 = vadd.f32 0.0, %v411
        %v413 = vpop.f32.mrf.mxu0
        %414 = vdwg.mxu0
        %v415 = vmax.f32 %v412, 0.0
        %vm416 = vcmask 31744
        %v418 = vsel %vm416, %v206, 0
        %v421 = vsel %vm416, %v207, 0
        %v424 = vsel %vm416, %v208, 0
        %v427 = vsel %vm416, %v209, 0
        %v430 = vsel %vm416, %v210, 0
        %v433 = vsel %vm416, %v211, 0
        %v436 = vsel %vm416, %v212, 0
        %v439 = vsel %vm416, %v213, 0
        %vm441 = vcmask 1043456
        %v443 = vsel %vm441, %v415, 0
        %445 = vmatprep.subr.mxu0 0.0
        %446 = vmatpush1.msra.mxu0 0.0
        %447 = vmatprep.subr.mxu0 0.0
        %448 = vmatpush1.msra.mxu0 0.0
        %449 = vmatprep.subr.mxu0 0.0
        %450 = vmatpush1.msra.mxu0 0.0
        %451 = vmatprep.subr.mxu0 0.0
        %452 = vmatpush1.msra.mxu0 0.0
        %453 = vmatprep.subr.mxu0 0.0
        %454 = vmatpush1.msra.mxu0 0.0
        %455 = vmatprep.subr.mxu0 0.0
        %456 = vmatpush1.msra.mxu0 0.0
        %457 = vmatprep.subr.mxu0 0.0
        %458 = vmatpush1.msra.mxu0 0.0
        %459 = vmatprep.subr.mxu0 0.0
        %460 = vmatpush1.msra.mxu0 0.0
        %461 = vmatprep.subr.mxu0 0.0
        %462 = vmatpush1.msra.mxu0 0.0
        %463 = vmatprep.subr.mxu0 0.0
        %464 = vmatpush1.msra.mxu0 0.0
        %465 = vmatprep.subr.mxu0 0.0
        %466 = vmatpush1.msra.mxu0 0.0
        %467 = vmatprep.subr.mxu0 0.0
        %468 = vmatpush1.msra.mxu0 0.0
        %469 = vmatprep.subr.mxu0 0.0
        %470 = vmatpush1.msra.mxu0 0.0
        %471 = vmatprep.subr.mxu0 0.0
        %472 = vmatpush1.msra.mxu0 0.0
        %473 = vmatprep.subr.mxu0 0.0
        %474 = vmatpush1.msra.mxu0 0.0
        %475 = vmatprep.subr.mxu0 0.0
        %476 = vmatpush1.msra.mxu0 %v443
        %477 = vmatprep.subr.mxu0 0.0
        %478 = vmatpush2.msra.mxu0 0.0
        %479 = vmatprep.subr.mxu0 0.0
        %480 = vmatpush2.msra.mxu0 0.0
        %481 = vmatprep.subr.mxu0 0.0
        %482 = vmatpush2.msra.mxu0 0.0
        %483 = vmatprep.subr.mxu0 0.0
        %484 = vmatpush2.msra.mxu0 0.0
        %485 = vmatprep.subr.mxu0 0.0
        %486 = vmatpush2.msra.mxu0 0.0
        %487 = vmatprep.subr.mxu0 0.0
        %488 = vmatpush2.msra.mxu0 0.0
        %489 = vmatprep.subr.mxu0 0.0
        %490 = vmatpush2.msra.mxu0 0.0
        %491 = vmatprep.subr.mxu0 0.0
        %492 = vmatpush2.msra.mxu0 0.0
        %493 = vmatprep.subr.mxu0 0.0
        %494 = vmatpush2.msra.mxu0 0.0
        %495 = vmatprep.subr.mxu0 0.0
        %496 = vmatpush2.msra.mxu0 0.0
        %497 = vmatprep.subr.mxu0 0.0
        %498 = vmatpush2.msra.mxu0 0.0
        %499 = vmatprep.subr.mxu0 0.0
        %500 = vmatpush2.msra.mxu0 0.0
        %501 = vmatprep.subr.mxu0 0.0
        %502 = vmatpush2.msra.mxu0 0.0
        %503 = vmatprep.subr.mxu0 0.0
        %504 = vmatpush2.msra.mxu0 0.0
        %505 = vmatprep.subr.mxu0 0.0
        %506 = vmatpush2.msra.mxu0 0.0
        %507 = vmatprep.subr.mxu0 0.0
        %508 = vmatpush2.msra.mxu0 0.0
        %509 = vmatprep.mubr.f32.mxu0 0.0
        %510 = vmatmul.mubr.f32.gmra.mxu0 %v418
        %v511 = vpop.f32.mrf.mxu0
        %v512 = vadd.f32 0.0, %v511
        %v513 = vpop.f32.mrf.mxu0
        %514 = vmatprep.mubr.f32.mxu0 0.0
        %515 = vmatmul.mubr.f32.gmra.mxu0 %v421
        %v516 = vpop.f32.mrf.mxu0
        %v517 = vadd.f32 0.0, %v516
        %v518 = vpop.f32.mrf.mxu0
        %519 = vmatprep.mubr.f32.mxu0 0.0
        %520 = vmatmul.mubr.f32.gmra.mxu0 %v424
        %v521 = vpop.f32.mrf.mxu0
        %v522 = vadd.f32 0.0, %v521
        %v523 = vpop.f32.mrf.mxu0
        %524 = vmatprep.mubr.f32.mxu0 0.0
        %525 = vmatmul.mubr.f32.gmra.mxu0 %v427
        %v526 = vpop.f32.mrf.mxu0
        %v527 = vadd.f32 0.0, %v526
        %v528 = vpop.f32.mrf.mxu0
        %529 = vmatprep.mubr.f32.mxu0 0.0
        %530 = vmatmul.mubr.f32.gmra.mxu0 %v430
        %v531 = vpop.f32.mrf.mxu0
        %v532 = vadd.f32 0.0, %v531
        %v533 = vpop.f32.mrf.mxu0
        %534 = vmatprep.mubr.f32.mxu0 0.0
        %535 = vmatmul.mubr.f32.gmra.mxu0 %v433
        %v536 = vpop.f32.mrf.mxu0
        %v537 = vadd.f32 0.0, %v536
        %v538 = vpop.f32.mrf.mxu0
        %539 = vmatprep.mubr.f32.mxu0 0.0
        %540 = vmatmul.mubr.f32.gmra.mxu0 %v436
        %v541 = vpop.f32.mrf.mxu0
        %v542 = vadd.f32 0.0, %v541
        %v543 = vpop.f32.mrf.mxu0
        %544 = vmatprep.mubr.f32.mxu0 0.0
        %545 = vmatmul.mubr.f32.gmra.mxu0 %v439
        %v546 = vpop.f32.mrf.mxu0
        %v547 = vadd.f32 0.0, %v546
        %v548 = vpop.f32.mrf.mxu0
        %549 = vdwg.mxu0
        %v551 = vsel %vm441, %v344, 0
        %553 = vmatprep.subr.mxu0 0.0
        %554 = vmatpush1.msra.mxu0 0.0
        %555 = vmatprep.subr.mxu0 0.0
        %556 = vmatpush1.msra.mxu0 0.0
        %557 = vmatprep.subr.mxu0 0.0
        %558 = vmatpush1.msra.mxu0 0.0
        %559 = vmatprep.subr.mxu0 0.0
        %560 = vmatpush1.msra.mxu0 0.0
        %561 = vmatprep.subr.mxu0 0.0
        %562 = vmatpush1.msra.mxu0 0.0
        %563 = vmatprep.subr.mxu0 0.0
        %564 = vmatpush1.msra.mxu0 0.0
        %565 = vmatprep.subr.mxu0 0.0
        %566 = vmatpush1.msra.mxu0 0.0
        %567 = vmatprep.subr.mxu0 0.0
        %568 = vmatpush1.msra.mxu0 0.0
        %569 = vmatprep.subr.mxu0 0.0
        %570 = vmatpush1.msra.mxu0 0.0
        %571 = vmatprep.subr.mxu0 0.0
        %572 = vmatpush1.msra.mxu0 0.0
        %573 = vmatprep.subr.mxu0 0.0
        %574 = vmatpush1.msra.mxu0 0.0
        %575 = vmatprep.subr.mxu0 0.0
        %576 = vmatpush1.msra.mxu0 0.0
        %577 = vmatprep.subr.mxu0 0.0
        %578 = vmatpush1.msra.mxu0 0.0
        %579 = vmatprep.subr.mxu0 0.0
        %580 = vmatpush1.msra.mxu0 0.0
        %581 = vmatprep.subr.mxu0 0.0
        %582 = vmatpush1.msra.mxu0 0.0
        %583 = vmatprep.subr.mxu0 0.0
        %584 = vmatpush1.msra.mxu0 %v551
        %585 = vmatprep.subr.mxu0 0.0
        %586 = vmatpush2.msra.mxu0 0.0
        %587 = vmatprep.subr.mxu0 0.0
        %588 = vmatpush2.msra.mxu0 0.0
        %589 = vmatprep.subr.mxu0 0.0
        %590 = vmatpush2.msra.mxu0 0.0
        %591 = vmatprep.subr.mxu0 0.0
        %592 = vmatpush2.msra.mxu0 0.0
        %593 = vmatprep.subr.mxu0 0.0
        %594 = vmatpush2.msra.mxu0 0.0
        %595 = vmatprep.subr.mxu0 0.0
        %596 = vmatpush2.msra.mxu0 0.0
        %597 = vmatprep.subr.mxu0 0.0
        %598 = vmatpush2.msra.mxu0 0.0
        %599 = vmatprep.subr.mxu0 0.0
        %600 = vmatpush2.msra.mxu0 0.0
        %601 = vmatprep.subr.mxu0 0.0
        %602 = vmatpush2.msra.mxu0 0.0
        %603 = vmatprep.subr.mxu0 0.0
        %604 = vmatpush2.msra.mxu0 0.0
        %605 = vmatprep.subr.mxu0 0.0
        %606 = vmatpush2.msra.mxu0 0.0
        %607 = vmatprep.subr.mxu0 0.0
        %608 = vmatpush2.msra.mxu0 0.0
        %609 = vmatprep.subr.mxu0 0.0
        %610 = vmatpush2.msra.mxu0 0.0
        %611 = vmatprep.subr.mxu0 0.0
        %612 = vmatpush2.msra.mxu0 0.0
        %613 = vmatprep.subr.mxu0 0.0
        %614 = vmatpush2.msra.mxu0 0.0
        %615 = vmatprep.subr.mxu0 0.0
        %616 = vmatpush2.msra.mxu0 0.0
        %617 = vmatprep.mubr.f32.mxu0 0.0
        %618 = vmatmul.mubr.f32.gmra.mxu0 %v418
        %v619 = vpop.f32.mrf.mxu0
        %v620 = vadd.f32 %v512, %v619
        %v621 = vpop.f32.mrf.mxu0
        %622 = vmatprep.mubr.f32.mxu0 0.0
        %623 = vmatmul.mubr.f32.gmra.mxu0 %v421
        %v624 = vpop.f32.mrf.mxu0
        %v625 = vadd.f32 %v517, %v624
        %v626 = vpop.f32.mrf.mxu0
        %627 = vmatprep.mubr.f32.mxu0 0.0
        %628 = vmatmul.mubr.f32.gmra.mxu0 %v424
        %v629 = vpop.f32.mrf.mxu0
        %v630 = vadd.f32 %v522, %v629
        %v631 = vpop.f32.mrf.mxu0
        %632 = vmatprep.mubr.f32.mxu0 0.0
        %633 = vmatmul.mubr.f32.gmra.mxu0 %v427
        %v634 = vpop.f32.mrf.mxu0
        %v635 = vadd.f32 %v527, %v634
        %v636 = vpop.f32.mrf.mxu0
        %637 = vmatprep.mubr.f32.mxu0 0.0
        %638 = vmatmul.mubr.f32.gmra.mxu0 %v430
        %v639 = vpop.f32.mrf.mxu0
        %v640 = vadd.f32 %v532, %v639
        %v641 = vpop.f32.mrf.mxu0
        %642 = vmatprep.mubr.f32.mxu0 0.0
        %643 = vmatmul.mubr.f32.gmra.mxu0 %v433
        %v644 = vpop.f32.mrf.mxu0
        %v645 = vadd.f32 %v537, %v644
        %v646 = vpop.f32.mrf.mxu0
        %647 = vmatprep.mubr.f32.mxu0 0.0
        %648 = vmatmul.mubr.f32.gmra.mxu0 %v436
        %v649 = vpop.f32.mrf.mxu0
        %v650 = vadd.f32 %v542, %v649
        %v651 = vpop.f32.mrf.mxu0
        %652 = vmatprep.mubr.f32.mxu0 0.0
        %653 = vmatmul.mubr.f32.gmra.mxu0 %v439
        %v654 = vpop.f32.mrf.mxu0
        %v655 = vadd.f32 %v547, %v654
        %v656 = vpop.f32.mrf.mxu0
        %657 = vdwg.mxu0
        %v658 = vsub.f32 0.0, %v620
        %v659 = vsub.f32 0.0, %v625
        %v660 = vsub.f32 0.0, %v630
        %v661 = vsub.f32 0.0, %v635
        %v662 = vsub.f32 0.0, %v640
        %v663 = vsub.f32 0.0, %v645
        %v664 = vsub.f32 0.0, %v650
        %v665 = vsub.f32 0.0, %v655
        %v666 = vmul.f32 %v658, 1.442695
        %v667 = vpow.pop %v666
        %v668 = vmul.f32 %v659, 1.442695
        %v669 = vpow.pop %v668
        %v670 = vmul.f32 %v660, 1.442695
        %v671 = vpow.pop %v670
        %v672 = vmul.f32 %v661, 1.442695
        %v673 = vpow.pop %v672
        %v674 = vmul.f32 %v662, 1.442695
        %v675 = vpow.pop %v674
        %v676 = vmul.f32 %v663, 1.442695
        %v677 = vpow.pop %v676
        %v678 = vmul.f32 %v664, 1.442695
        %v679 = vpow.pop %v678
        %v680 = vmul.f32 %v665, 1.442695
        %v681 = vpow.pop %v680
        %v682 = vadd.f32 %v667, 1.0
        %v683 = vadd.f32 %v669, 1.0
        %v684 = vadd.f32 %v671, 1.0
        %v685 = vadd.f32 %v673, 1.0
        %v686 = vadd.f32 %v675, 1.0
        %v687 = vadd.f32 %v677, 1.0
        %v688 = vadd.f32 %v679, 1.0
        %v689 = vadd.f32 %v681, 1.0
        %v690 = vrcp.pop %v682
        %v691 = vmul.f32 1.0, %v690
        %v692 = vrcp.pop %v683
        %v693 = vmul.f32 1.0, %v692
        %v694 = vrcp.pop %v684
        %v695 = vmul.f32 1.0, %v694
        %v696 = vrcp.pop %v685
        %v697 = vmul.f32 1.0, %v696
        %v698 = vrcp.pop %v686
        %v699 = vmul.f32 1.0, %v698
        %v700 = vrcp.pop %v687
        %v701 = vmul.f32 1.0, %v700
        %v702 = vrcp.pop %v688
        %v703 = vmul.f32 1.0, %v702
        %v704 = vrcp.pop %v689
        %v705 = vmul.f32 1.0, %v704
        %707 = vset.pattern.permute.xlu0 0
        %708 = vperm.xlu0 %707, %v691
        %v709 = vpop.permute.xlu0 %708
        %712 = vset.pattern.permute.xlu0 0
        %713 = vperm.xlu0 %712, %v693
        %v714 = vpop.permute.xlu0 %713
        %717 = vset.pattern.permute.xlu0 0
        %718 = vperm.xlu0 %717, %v695
        %v719 = vpop.permute.xlu0 %718
        %722 = vset.pattern.permute.xlu0 0
        %723 = vperm.xlu0 %722, %v697
        %v724 = vpop.permute.xlu0 %723
        %727 = vset.pattern.permute.xlu0 0
        %728 = vperm.xlu0 %727, %v699
        %v729 = vpop.permute.xlu0 %728
        %732 = vset.pattern.permute.xlu0 0
        %733 = vperm.xlu0 %732, %v701
        %v734 = vpop.permute.xlu0 %733
        %737 = vset.pattern.permute.xlu0 0
        %738 = vperm.xlu0 %737, %v703
        %v739 = vpop.permute.xlu0 %738
        %742 = vset.pattern.permute.xlu0 0
        %743 = vperm.xlu0 %742, %v705
        %v744 = vpop.permute.xlu0 %743
        %v746 = vmul.f32 %v189, %v709
        %v747 = vmul.f32 %v190, %v709
        %v748 = vmul.f32 %v191, %v714
        %v749 = vmul.f32 %v192, %v714
        %v750 = vmul.f32 %v193, %v719
        %v751 = vmul.f32 %v194, %v719
        %v752 = vmul.f32 %v195, %v724
        %v753 = vmul.f32 %v196, %v724
        %v754 = vmul.f32 %v197, %v729
        %v755 = vmul.f32 %v198, %v729
        %v756 = vmul.f32 %v199, %v734
        %v757 = vmul.f32 %v200, %v734
        %v758 = vmul.f32 %v201, %v739
        %v759 = vmul.f32 %v202, %v739
        %v760 = vmul.f32 %v203, %v744
        %v761 = vmul.f32 %v204, %v744
        %762 = vst [vmem:[%s188] sm:$0xff] %v746
        %763 = vst [vmem:[%s188 + $0x8] sm:$0xff] %v747
        %764 = vst [vmem:[%s188 + $0x10] sm:$0xff] %v748
        %765 = vst [vmem:[%s188 + $0x18] sm:$0xff] %v749
        %766 = vst [vmem:[%s188 + $0x20] sm:$0xff] %v750
        %767 = vst [vmem:[%s188 + $0x28] sm:$0xff] %v751
        %768 = vst [vmem:[%s188 + $0x30] sm:$0xff] %v752
        %769 = vst [vmem:[%s188 + $0x38] sm:$0xff] %v753
        %770 = vst [vmem:[%s188 + $0x40] sm:$0xff] %v754
        %771 = vst [vmem:[%s188 + $0x48] sm:$0xff] %v755
        %772 = vst [vmem:[%s188 + $0x50] sm:$0xff] %v756
        %773 = vst [vmem:[%s188 + $0x58] sm:$0xff] %v757
        %774 = vst [vmem:[%s188 + $0x60] sm:$0xff] %v758
        %775 = vst [vmem:[%s188 + $0x68] sm:$0xff] %v759
        %776 = vst [vmem:[%s188 + $0x70] sm:$0xff] %v760
        %777 = vst [vmem:[%s188 + $0x78] sm:$0xff] %v761
        %s778 = sand.u32 %s96, 1
        %s779 = scalar_lea.sflag [#allocation4], %s778
        %s780 = sand.u32 %s96, 1
        %s781 = smul.addr %s780, 128
        %s782 = scalar_lea.vmem [#allocation5], %s781
        // Predicated region
        $region37: #{tpu_custom_call.1} parent=31 // pred_check
          %p783 = pneg %p106
        $region38: #{tpu_custom_call.1} parent=31 // pred_check_branch
          %785 = sbr.rel (%p783) target = $region40
        $region39: #{tpu_custom_call.1} parent=31 // pred_region
          %s787 = ssub.s32 2048, 2048
          %788 = vsyncadd %s779, %s787
          %s789 = smul.addr %s20, 16
          %s790 = smul.addr %s789, 128
          %s791 = scalar_lea.hbm %s3, %s790
          %s792 = sshll.u32 %s782, 4
          %s793 = int_to_ptr.vmem [resolvable:$true] %s792
          %798 = dma.vmem_to_hbm [thread:$0]  %s793, 2048, %s791, %s779, 256, 256, 16
        $region40: #{tpu_custom_call.1} parent=31 // pred_fallthru
          _
      $region32: #{tpu_custom_call.1} parent=5 // pred_fallthru
        _
      %p799 = scmp.le.s32.totalorder 2, %s15
      // Predicated region
      $region41: #{tpu_custom_call.1} parent=5 // pred_check
        %p800 = pneg %p799
      $region42: #{tpu_custom_call.1} parent=5 // pred_check_branch
        %802 = sbr.rel (%p800) target = $region44
      $region43: #{tpu_custom_call.1} parent=5 // pred_region
        %s803 = ssub.s32 %s15, 2
        // Predicated region
        $region45: #{tpu_custom_call.1} parent=43 // pred_check
          %p804 = pneg %p112
        $region46: #{tpu_custom_call.1} parent=43 // pred_check_branch
          %806 = sbr.rel (%p804) target = $region48
        $region47: #{tpu_custom_call.1} parent=43 // pred_region
          %s807 = sand.u32 %s97, 1
          %s808 = scalar_lea.sflag [#allocation4], %s807
          %s809 = sand.u32 %s97, 1
          %s810 = smul.addr %s809, 128
          %s811 = scalar_lea.vmem [#allocation5], %s810
          %812 = dma.done %s808, 2048
        $region48: #{tpu_custom_call.1} parent=43 // pred_fallthru
          _
      $region44: #{tpu_custom_call.1} parent=5 // pred_fallthru
        _
    $region6: #{tpu_custom_call.1} parent=1 // loop_footer
      %s19 = sadd.s32 1, %s15
    $region7: #{tpu_custom_call.1} parent=1 // loop_footer_branch
      %14 = sbr.rel target = $region3
    $region8: #{tpu_custom_call.1} parent=1 // loop_exit
      _
    %813 = vsyncpa [#allocation3], 1
    %s814 = scalar_lea.sflag [#allocation3], 1
    %815 = vsyncpa %s814, 1
    %816 = vsyncpa [#allocation4], 1
    %s817 = scalar_lea.sflag [#allocation4], 1
    %818 = vsyncpa %s817, 1

</llo_original>
